<compile_context>
chip_gen: v5e
topology: v5e:2x2
jax: 0.10.0
libtpu: 0.0.40
codegen_flags: <defaults>
</compile_context>

<pallas_src>
import functools

import jax
import jax.numpy as jnp
from jax import lax
from jax.experimental import pallas as pl
from jax.experimental.pallas import tpu as pltpu


def _dropout_kernel(seed_ref, x_ref, o_ref, *, threshold: int, scale: float):
    """Elementwise dropout on one (rows, cols) tile.

    keep(e)  <=>  hash(seed, flat_index(e)) >= threshold,  threshold ≈ p * 2^32.
    """
    rows, cols = x_ref.shape

    # Global flat index (row-major over the full 2-D slab).  Keyed on the
    # global index, the mask is independent of how the slab is tiled.
    row0 = pl.program_id(0) * rows
    r = lax.broadcasted_iota(jnp.int32, (rows, cols), 0)
    c = lax.broadcasted_iota(jnp.int32, (rows, cols), 1)
    idx = ((row0 + r) * cols + c).astype(jnp.uint32)

    # Counter-based hash: golden-ratio premix of (index, seed) + murmur3 fmix32.
    seed = seed_ref[0].astype(jnp.uint32)
    h = idx * jnp.uint32(0x9E3779B1) + seed * jnp.uint32(0x85EBCA77)
    h = h ^ (h >> 16)
    h = h * jnp.uint32(0x85EBCA6B)
    h = h ^ (h >> 13)
    h = h * jnp.uint32(0xC2B2AE35)
    h = h ^ (h >> 16)

    # Integer threshold compare: P(drop) = threshold / 2^32 = p (bias < 2^-32).
    keep = h >= jnp.uint32(threshold)

    # Select + scale in the input dtype (weakly-typed Python-float scale keeps
    # bf16 native on v6e/v7x).
    x = x_ref[...]
    o_ref[...] = jnp.where(keep, x * scale, 0).astype(o_ref.dtype)


def _lane_dense_layout(n, last_dim):
    """Factor n into (rows, cols) with cols a wide multiple of 128 when
    possible, so output stores are unmasked and lane-dense."""
    for cols in (4096, 2048, 1024, 512, 256, 128):
        if n % cols == 0:
            return n // cols, cols
    # Fallback: keep the original trailing dim (correct; stores may be masked).
    return n // last_dim, last_dim


def _pick_tile_rows(rows, cols, itemsize, max_block_bytes=1 << 20):
    """Largest row tile that divides `rows`, respects sublane packing
    (8 rows for 4-byte, 16 for 2-byte, 32 for 1-byte dtypes) and keeps one
    block <= ~1 MiB, so 2x(in)+2x(out) buffers plus the int32 hash
    intermediates fit comfortably under the scoped-VMEM limit on every
    generation (incl. v7x's 64 MiB physical VMEM)."""
    quantum = max(8, 32 // max(1, itemsize))
    max_rows = max(quantum, max_block_bytes // max(1, cols * itemsize))
    if rows <= max_rows:
        return rows
    t = (min(rows, max_rows) // quantum) * quantum
    while t >= quantum:
        if rows % t == 0:
            return t
        t -= quantum
    return rows  # no suitable divisor: fall back to a single (full) block


def fairseq_dropout(x, p: float, seed: int, *, training: bool = True):
    """JAX/Pallas equivalent of FairseqDropout.forward.

    training mirrors `self.training or self.apply_during_inference`.
    """
    p = float(p)
    if (not training) or p == 0.0 or x.size == 0:
        return x  # eval path / p == 0: identity, exactly like the module
    if p >= 1.0:
        return jnp.zeros_like(x)

    orig_shape = x.shape
    n = x.size
    last_dim = orig_shape[-1] if x.ndim >= 1 else 1
    rows, cols = _lane_dense_layout(n, last_dim)
    x2d = x.reshape(rows, cols)

    tile_r = _pick_tile_rows(rows, cols, x2d.dtype.itemsize)
    grid = (rows // tile_r,)

    threshold = min(int(round(p * 4294967296.0)), 4294967295)
    scale = 1.0 / (1.0 - p)
    kernel = functools.partial(_dropout_kernel, threshold=threshold, scale=scale)

    seed_arr = jnp.asarray([seed], dtype=jnp.int32)

    out2d = pl.pallas_call(
        kernel,
        out_shape=jax.ShapeDtypeStruct((rows, cols), x2d.dtype),
        grid_spec=pltpu.PrefetchScalarGridSpec(
            num_scalar_prefetch=1,  # seed lands in SMEM
            grid=grid,
            in_specs=[pl.BlockSpec((tile_r, cols), lambda i, seed_ref: (i, 0))],
            out_specs=pl.BlockSpec((tile_r, cols), lambda i, seed_ref: (i, 0)),
        ),
        compiler_params=pltpu.CompilerParams(
            # Row tiles are independent -> shard across both TCs on v7x.
            dimension_semantics=("parallel",),
        ),
    )(seed_arr, x2d)

    return out2d.reshape(orig_shape)


if __name__ == "__main__":
    key = jax.random.PRNGKey(0)

    # --- Small shape matching the module's typical (batch, seq, hidden) use.
    batch, seq, hidden = 2, 8, 32
    x = jax.random.normal(key, (batch, seq, hidden), dtype=jnp.float32)
    p = 0.1
    y = jax.block_until_ready(fairseq_dropout(x, p=p, seed=1234, training=True))
    scale = 1.0 / (1.0 - p)
    is_zero = jnp.isclose(y, 0.0)
    is_scaled = jnp.isclose(y, x * scale, rtol=1e-5, atol=1e-6)
    assert bool(jnp.all(is_zero | is_scaled)), "dropout output values invalid"
    keep_frac = float(jnp.mean((~is_zero).astype(jnp.float32)))
    assert 0.7 < keep_frac <= 1.0, f"unexpected keep fraction {keep_frac}"

    # --- Eval mode: identity.
    y_eval = jax.block_until_ready(fairseq_dropout(x, p=p, seed=1234, training=False))
    assert bool(jnp.all(y_eval == x)), "eval mode must be identity"

    # --- Larger slab to exercise the tiled / pipelined (grid > 1) path.
    x_big = jax.random.normal(key, (8, 256, 512), dtype=jnp.float32)
    p_big = 0.25
    y_big = jax.block_until_ready(fairseq_dropout(x_big, p=p_big, seed=7, training=True))
    scale_big = 1.0 / (1.0 - p_big)
    zero_b = jnp.isclose(y_big, 0.0)
    scaled_b = jnp.isclose(y_big, x_big * scale_big, rtol=1e-5, atol=1e-6)
    assert bool(jnp.all(zero_b | scaled_b)), "tiled dropout output values invalid"
    keep_b = float(jnp.mean((~zero_b).astype(jnp.float32)))
    assert abs(keep_b - (1.0 - p_big)) < 0.02, f"keep fraction off: {keep_b}"

    # --- bf16 path: compute stays native bf16 (scale=2.0 is exact in bf16).
    x16 = jax.random.normal(key, (2, 8, 128), dtype=jnp.bfloat16)
    y16 = jax.block_until_ready(fairseq_dropout(x16, p=0.5, seed=99, training=True))
    ok16 = (y16 == 0) | (y16 == x16 * jnp.bfloat16(2.0))
    assert bool(jnp.all(ok16)), "bf16 dropout output values invalid"

    print("KERNEL_OK")
</pallas_src>

<mosaic_0001>
module attributes {stable_mosaic.version = 11 : i64} {
  func.func @_dropout_kernel(%arg0: i32, %arg1: memref<1xi32, #tpu.memory_space<smem>>, %arg2: memref<1x512xf32, #tpu.memory_space<vmem>>, %arg3: memref<1x512xf32, #tpu.memory_space<vmem>>) attributes {dimension_semantics = [#tpu.dimension_semantics<parallel>], iteration_bounds = array<i64: 1>, scalar_prefetch = 1 : i64, scratch_operands = 0 : i64, tpu.core_type = #tpu.core_type<tc>, window_params = [{transform_indices = @transform_0, window_bounds = array<i64: 1, 512>}, {transform_indices = @transform_1, window_bounds = array<i64: 1, 512>}]} {
    %c1_i32 = arith.constant 1 : i32
    %0 = arith.muli %arg0, %c1_i32 : i32
    %1 = tpu.iota {dimensions = array<i32: 0>} : vector<1x512xi32>
    %2 = tpu.iota {dimensions = array<i32: 1>} : vector<1x512xi32>
    %3 = vector.broadcast %0 : i32 to vector<1x512xi32>
    %4 = arith.addi %3, %1 : vector<1x512xi32>
    %c512_i32 = arith.constant 512 : i32
    %5 = vector.broadcast %c512_i32 : i32 to vector<1x512xi32>
    %6 = arith.muli %4, %5 : vector<1x512xi32>
    %7 = arith.addi %6, %2 : vector<1x512xi32>
    %c0 = arith.constant 0 : index
    %8 = memref.load %arg1[%c0] : memref<1xi32, #tpu.memory_space<smem>>
    %c-1640531535_i32 = arith.constant -1640531535 : i32
    %9 = vector.broadcast %c-1640531535_i32 : i32 to vector<1x512xi32>
    %10 = arith.muli %7, %9 : vector<1x512xi32>
    %c-2048144777_i32 = arith.constant -2048144777 : i32
    %11 = arith.muli %8, %c-2048144777_i32 : i32
    %12 = vector.broadcast %11 : i32 to vector<1x512xi32>
    %13 = arith.addi %10, %12 : vector<1x512xi32>
    %c16_i32 = arith.constant 16 : i32
    %14 = vector.broadcast %c16_i32 : i32 to vector<1x512xi32>
    %15 = arith.shrui %13, %14 : vector<1x512xi32>
    %16 = arith.xori %13, %15 : vector<1x512xi32>
    %c-2048144789_i32 = arith.constant -2048144789 : i32
    %17 = vector.broadcast %c-2048144789_i32 : i32 to vector<1x512xi32>
    %18 = arith.muli %16, %17 : vector<1x512xi32>
    %c13_i32 = arith.constant 13 : i32
    %19 = vector.broadcast %c13_i32 : i32 to vector<1x512xi32>
    %20 = arith.shrui %18, %19 : vector<1x512xi32>
    %21 = arith.xori %18, %20 : vector<1x512xi32>
    %c-1028477387_i32 = arith.constant -1028477387 : i32
    %22 = vector.broadcast %c-1028477387_i32 : i32 to vector<1x512xi32>
    %23 = arith.muli %21, %22 : vector<1x512xi32>
    %c16_i32_0 = arith.constant 16 : i32
    %24 = vector.broadcast %c16_i32_0 : i32 to vector<1x512xi32>
    %25 = arith.shrui %23, %24 : vector<1x512xi32>
    %26 = arith.xori %23, %25 : vector<1x512xi32>
    %c429496730_i32 = arith.constant 429496730 : i32
    %27 = vector.broadcast %c429496730_i32 : i32 to vector<1x512xi32>
    %28 = arith.cmpi uge, %26, %27 : vector<1x512xi32>
    %c0_1 = arith.constant 0 : index
    %c0_2 = arith.constant 0 : index
    %29 = vector.load %arg2[%c0_1, %c0_2] : memref<1x512xf32, #tpu.memory_space<vmem>>, vector<1x512xf32>
    %cst = arith.constant 1.11111116 : f32
    %30 = vector.broadcast %cst : f32 to vector<1x512xf32>
    %31 = arith.mulf %29, %30 : vector<1x512xf32>
    %c0_i32 = arith.constant 0 : i32
    %32 = arith.sitofp %c0_i32 : i32 to f32
    %33 = vector.broadcast %32 : f32 to vector<1x512xf32>
    %34 = arith.select %28, %31, %33 : vector<1x512xi1>, vector<1x512xf32>
    %c0_3 = arith.constant 0 : index
    %c0_4 = arith.constant 0 : index
    %35 = vector.load %arg3[%c0_3, %c0_4] : memref<1x512xf32, #tpu.memory_space<vmem>>, vector<1x512xf32>
    tpu.vector_store %arg3[%c0_3, %c0_4], %34 {strides = array<i32>} : memref<1x512xf32, #tpu.memory_space<vmem>>, vector<1x512xf32>,
    return
  }
  func.func @transform_0(%arg0: i32, %arg1: memref<1xi32, #tpu.memory_space<smem>>) -> (i32, i32) {
    %c0_i32 = arith.constant 0 : i32
    %c0_i32_0 = arith.constant 0 : i32
    return %arg0, %c0_i32 : i32, i32
  }
  func.func @transform_1(%arg0: i32, %arg1: memref<1xi32, #tpu.memory_space<smem>>) -> (i32, i32) {
    %c0_i32 = arith.constant 0 : i32
    %c0_i32_0 = arith.constant 0 : i32
    return %arg0, %c0_i32 : i32, i32
  }
}

</mosaic_0001>

<llo_original>
// kernel: tpu_custom_call.1
$region0: #{tpu_custom_call.1}
  #allocation0 [shape = 'u32[]', space=smem, size = 0x4, offset = 0x4, fixed_abs, tag = 'smem constant byte address 0x4 - core index']
  #allocation1 [shape = 'u32[72,128]{1,0:T(1,128)}', space=vmem, size = 0x9000, scoped, tag = 'internal scratch']
  #allocation2 [shape = 's32[1]{0}', space=sflag, size = 0x4, scoped, tag = 'scoped memory for tpu_custom_call.1']
  #allocation3 [shape = 's32[1]{0:T(128)S(6)}', space=smem, size = 0x200, scoped, tag = 'prefetched SMEM operand 0']
  %s0 = inlined_call_operand.<no memory space> [shape: s32[1], index: 0, kind: input, shape index: {}]
  %s1 = inlined_call_operand.hbm [shape: f32[1,512], index: 1, kind: input, shape index: {}]
  %s2 = inlined_call_operand.hbm [shape: f32[1,512], index: 2, kind: output, shape index: {}]
  %s3 = sld [smem:[#allocation0]]
  $region18: #{tpu_custom_call.1} parent=0
    _
  %s5 = ssub.s32 1, %s3
  %s6 = scalar_select 0, %s5, %s3
  %7 = sst [smem:[#allocation3]] %s0
  $region1: #{tpu_custom_call.1} parent=0
    #allocation4 [shape = 'u8[2048]{0}', space=vmem, size = 0x800, scoped, tag = 'input window, operand 1, single buffered']
    #allocation5 [shape = 's32[1]{0}', space=sflag, size = 0x4, scoped, tag = 'scoped memory for tpu_custom_call.1']
    #allocation6 [shape = 's32[1]{0}', space=sflag, size = 0x4, scoped, tag = 'scoped memory for tpu_custom_call.1']
    #allocation7 [shape = 'u8[2048]{0}', space=vmem, size = 0x800, scoped, tag = 'output window, operand 0, single buffered']
    %8 = vsyncpa [#allocation5], 0
    %9 = vsyncpa [#allocation6], 0
    // Predicated region
    $region2: #{tpu_custom_call.1} parent=1 // pred_check
      _
    $region3: #{tpu_custom_call.1} parent=1 // pred_check_branch
      %11 = sbr.rel (0) target = $region5
    $region4: #{tpu_custom_call.1} parent=1 // pred_region
      %13 = vsyncadd [#allocation5], 0
      %s15 = sshll.u32 %s1, 4
      %s16 = int_to_ptr.hbm [resolvable:$true] %s15
      %s17 = sshll.u32 [#allocation4], 4
      %s18 = int_to_ptr.vmem [resolvable:$true] %s17
      %20 = dma.hbm_to_vmem [thread:$0]  %s16, 64, %s18, [#allocation5]
    $region5: #{tpu_custom_call.1} parent=1 // pred_fallthru
      _
    // Predicated region
    $region6: #{tpu_custom_call.1} parent=1 // pred_check
      _
    $region7: #{tpu_custom_call.1} parent=1 // pred_check_branch
      %22 = sbr.rel (0) target = $region9
    $region8: #{tpu_custom_call.1} parent=1 // pred_region
      %24 = dma.done [#allocation5], 64
    $region9: #{tpu_custom_call.1} parent=1 // pred_fallthru
      _
    %v25 = vlaneseq
    %v26 = vshrl.u32 %v25, 7
    %v27 = vlaneseq
    %v28 = vand.u32 %v27, 127
    %v29 = vadd.s32 %v28, 128
    %v30 = vadd.s32 %v28, 256
    %v31 = vadd.s32 %v28, 384
    %v32 = vstv 0
    %v33 = vadd.s32 %v32, %v26
    %v34 = vmul.u32 %v33, 512
    %v35 = vadd.s32 %v34, %v28
    %v36 = vadd.s32 %v34, %v29
    %v37 = vadd.s32 %v34, %v30
    %v38 = vadd.s32 %v34, %v31
    %s39 = sld [smem:[#allocation3]]
    %v40 = vmul.u32 %v35, 2654435761
    %v41 = vmul.u32 %v36, 2654435761
    %v42 = vmul.u32 %v37, 2654435761
    %v43 = vmul.u32 %v38, 2654435761
    %s44 = smul.u32 %s39, 2246822519
    %v45 = vstv %s44
    %v46 = vadd.s32 %v40, %v45
    %v47 = vadd.s32 %v41, %v45
    %v48 = vadd.s32 %v42, %v45
    %v49 = vadd.s32 %v43, %v45
    %v50 = vshrl.u32 %v46, 16
    %v51 = vshrl.u32 %v47, 16
    %v52 = vshrl.u32 %v48, 16
    %v53 = vshrl.u32 %v49, 16
    %v54 = vxor.u32 %v46, %v50
    %v55 = vxor.u32 %v47, %v51
    %v56 = vxor.u32 %v48, %v52
    %v57 = vxor.u32 %v49, %v53
    %v58 = vmul.u32 %v54, 2246822507
    %v59 = vmul.u32 %v55, 2246822507
    %v60 = vmul.u32 %v56, 2246822507
    %v61 = vmul.u32 %v57, 2246822507
    %v62 = vshrl.u32 %v58, 13
    %v63 = vshrl.u32 %v59, 13
    %v64 = vshrl.u32 %v60, 13
    %v65 = vshrl.u32 %v61, 13
    %v66 = vxor.u32 %v58, %v62
    %v67 = vxor.u32 %v59, %v63
    %v68 = vxor.u32 %v60, %v64
    %v69 = vxor.u32 %v61, %v65
    %v70 = vmul.u32 %v66, 3266489909
    %v71 = vmul.u32 %v67, 3266489909
    %v72 = vmul.u32 %v68, 3266489909
    %v73 = vmul.u32 %v69, 3266489909
    %v74 = vshrl.u32 %v70, 16
    %v75 = vshrl.u32 %v71, 16
    %v76 = vshrl.u32 %v72, 16
    %v77 = vshrl.u32 %v73, 16
    %v78 = vxor.u32 %v70, %v74
    %v79 = vxor.u32 %v71, %v75
    %v80 = vxor.u32 %v72, %v76
    %v81 = vxor.u32 %v73, %v77
    %v82 = vadd.s32 %v78, 2147483648
    %vm84 = vcmp.ge.s32.totalorder %v82, 2576980378
    %v85 = vadd.s32 %v79, 2147483648
    %vm87 = vcmp.ge.s32.totalorder %v85, 2576980378
    %v88 = vadd.s32 %v80, 2147483648
    %vm90 = vcmp.ge.s32.totalorder %v88, 2576980378
    %v91 = vadd.s32 %v81, 2147483648
    %vm93 = vcmp.ge.s32.totalorder %v91, 2576980378
    %v94 = vld [vmem:[#allocation4] sm:$0xf]
    %v95 = vmul.f32 %v94, 1.1111112
    %v97 = vperm.slane %v95, 0
    %v98 = vperm.slane %v95, 1
    %v99 = vperm.slane %v95, 2
    %v100 = vperm.slane %v95, 3
    %v105 = vsel %vm84, %v97, 0.0
    %v106 = vsel %vm87, %v98, 0.0
    %v107 = vsel %vm90, %v99, 0.0
    %v108 = vsel %vm93, %v100, 0.0
    %v113 = vrot.slane %v106, 7
    %v114 = vrot.slane %v107, 6
    %v115 = vrot.slane %v108, 5
    %vm116 = vcmask 1040384
    %v117 = vsel %vm116, %v105, %v113
    %vm118 = vcmask 1042434
    %v119 = vsel %vm118, %v114, %v115
    %vm120 = vcmask 1041408
    %v121 = vsel %vm120, %v117, %v119
    %v123 = vlaneseq
    %vm124 = vcmp.ge.s32.totalorder %v123, 0
    %vm125 = vcmp.lt.s32.totalorder %v123, 512
    %vm126 = vmand %vm124, %vm125
    %127 = vst.msk [vmem:[#allocation7] sm:$0xf] %vm126, %v121
    // Predicated region
    $region10: #{tpu_custom_call.1} parent=1 // pred_check
      _
    $region11: #{tpu_custom_call.1} parent=1 // pred_check_branch
      %129 = sbr.rel (0) target = $region13
    $region12: #{tpu_custom_call.1} parent=1 // pred_region
      %131 = vsyncadd [#allocation6], 0
      %s133 = sshll.u32 [#allocation7], 4
      %s134 = int_to_ptr.vmem [resolvable:$true] %s133
      %s135 = sshll.u32 %s2, 4
      %s136 = int_to_ptr.hbm [resolvable:$true] %s135
      %138 = dma.vmem_to_hbm [thread:$0]  %s134, 64, %s136, [#allocation6]
    $region13: #{tpu_custom_call.1} parent=1 // pred_fallthru
      _
    // Predicated region
    $region14: #{tpu_custom_call.1} parent=1 // pred_check
      _
    $region15: #{tpu_custom_call.1} parent=1 // pred_check_branch
      %140 = sbr.rel (0) target = $region17
    $region16: #{tpu_custom_call.1} parent=1 // pred_region
      %142 = dma.done [#allocation6], 64
    $region17: #{tpu_custom_call.1} parent=1 // pred_fallthru
      _
    %143 = vsyncpa [#allocation5], 1
    %144 = vsyncpa [#allocation6], 1

</llo_original>
